<compile_context>
chip_gen: v6e
topology: v6e:2x2x1
jax: 0.10.0
libtpu: 0.0.40
codegen_flags: <defaults>
</compile_context>

<pallas_src>
import jax
import jax.numpy as jnp
from jax.experimental import pallas as pl
from jax.experimental.pallas import tpu as pltpu


def _nn_loss_kernel(x_ref, w_ref, b_ref, lbl_ref, logits_ref, loss_ref):
    # logits = x @ W + b  (MXU matmul, f32 accumulation; x/W may be bf16).
    # Padded class columns carry bias -1e30, so they vanish from the logsumexp below
    # with no per-step compare/select mask.
    logits = jnp.dot(x_ref[...], w_ref[...], preferred_element_type=jnp.float32)
    logits = logits + b_ref[...]
    logits_ref[...] = logits.astype(logits_ref.dtype)

    tm, c_pad = logits.shape
    col_ids = jax.lax.broadcasted_iota(jnp.int32, (tm, c_pad), 1)

    # Numerically stable cross-entropy per row: lse(logits) - logits[label].
    m = jnp.max(logits, axis=-1, keepdims=True)
    lse = m + jnp.log(jnp.sum(jnp.exp(logits - m), axis=-1, keepdims=True))

    # Target logit gathered via iota == label (labels are a (tm, 1) int32 tile, assumed in [0, C);
    # out-of-range labels silently contribute 0, unlike PyTorch which raises).
    tgt = jnp.sum(jnp.where(col_ids == lbl_ref[...], logits, 0.0),
                  axis=-1, keepdims=True)

    # Per-row losses.  Padded batch rows are sliced off in the wrapper, so no row mask here,
    # and there is no cross-tile carry -> the batch grid axis stays fully parallel.
    loss_ref[...] = lse - tgt


def _round_up(v, m):
    return (v + m - 1) // m * m


def _vmem_budget_bytes():
    """Generation-aware VMEM budget (75% of capacity; conservative v7x-safe fallback)."""
    try:
        cap = getattr(pltpu.get_tpu_info(), "vmem_capacity_bytes", None)
        if cap:
            return (int(cap) * 3) // 4          # ~96 MiB on v5e/v6e, ~48 MiB on v7x
    except Exception:
        pass
    return 48 * 1024 * 1024                     # safe under v7x's 64 MiB


def _cast_pad(a, dtype, pad_rows, pad_cols, value=0):
    """Cast + pad as one fused pass; skipped entirely when it is a no-op."""
    if a.dtype != jnp.dtype(dtype):
        a = a.astype(dtype)
    if pad_rows or pad_cols:
        a = jnp.pad(a, ((0, pad_rows), (0, pad_cols)), constant_values=value)
    return a


def neural_network_forward(x, w, b, labels, num_classes, *,
                           tile_m=None, compute_dtype=jnp.float32,
                           logits_dtype=jnp.float32):
    """x: (B, H), w: (H, C), b: (C,), labels: (B,) int32 in [0, C).
    Returns (logits (B, C) logits_dtype, mean CE loss () f32)."""
    B, H = x.shape
    C = num_classes
    assert w.shape == (H, C) and b.shape == (C,) and labels.shape == (B,)

    in_dtype = jnp.dtype(compute_dtype)
    in_sz = in_dtype.itemsize
    out_sz = jnp.dtype(logits_dtype).itemsize

    # Lane-dense contraction and class dims (multiples of 128; zero padding -> result unchanged).
    H_pad = _round_up(H, 128)
    C_pad = _round_up(C, 128)

    # bf16 needs 16-row sublane packing; f32 needs 8.
    sublane = 16 if in_dtype == jnp.dtype(jnp.bfloat16) else 8
    budget = _vmem_budget_bytes()

    def vmem_need(tm):
        return (2 * tm * H_pad * in_sz          # x tiles (double-buffered)
                + 2 * tm * C_pad * out_sz       # logits tiles (double-buffered)
                + 2 * tm * 128 * 4              # label tiles (lane-padded int32)
                + 2 * tm * 128 * 4              # per-row loss tiles
                + H_pad * C_pad * in_sz         # W (resident, single-buffered)
                + 8 * C_pad * 4)                # b (resident, single-buffered)

    if tile_m is None:
        cap_m = max(_round_up(B, sublane), sublane)
        tile_m = sublane
        for cand in (1024, 512, 256, 128, 64, 32, 16, 8):
            if cand % sublane or cand > cap_m:
                continue
            if vmem_need(cand) <= budget:
                tile_m = cand
                break
    tile_m = max(sublane, (tile_m // sublane) * sublane)

    B_pad = _round_up(B, tile_m)
    num_tiles = B_pad // tile_m

    # Wrapper-side cast/pad (single fused pass each; skipped when already aligned).
    # TODO(synk): hoist wp/bp padding out of the per-call path when weights are reused across calls.
    # TODO(synk): add a class-dim (N) grid axis with an online logsumexp for Ws too large to stay
    #             resident (H_pad*C_pad*in_sz > ~budget/3); unnecessary at these sizes.
    xp = _cast_pad(x, in_dtype, B_pad - B, H_pad - H)
    wp = _cast_pad(w, in_dtype, H_pad - H, C_pad - C)
    # Padded class columns get bias -1e30 so they vanish from the in-kernel logsumexp.
    bp = _cast_pad(b.reshape(1, C), jnp.float32, 0, C_pad - C, value=-1e30)
    lp = _cast_pad(labels.reshape(B, 1), jnp.int32, B_pad - B, 0)

    vmem_limit = int(min(max(2 * vmem_need(tile_m), 16 * 1024 * 1024), budget))

    cost = pl.CostEstimate(
        flops=2 * B_pad * H_pad * C_pad,
        transcendentals=B_pad * C_pad + B_pad,
        bytes_accessed=(B_pad * H_pad * in_sz + H_pad * C_pad * in_sz + C_pad * 4
                        + B_pad * 4 + B_pad * C_pad * out_sz + B_pad * 4),
    )

    logits_pad, per_row = pl.pallas_call(
        _nn_loss_kernel,
        out_shape=(
            jax.ShapeDtypeStruct((B_pad, C_pad), logits_dtype),
            jax.ShapeDtypeStruct((B_pad, 1), jnp.float32),
        ),
        grid_spec=pltpu.PrefetchScalarGridSpec(
            num_scalar_prefetch=0,
            grid=(num_tiles,),
            in_specs=[
                pl.BlockSpec((tile_m, H_pad), lambda i: (i, 0)),        # x tile (pipelined)
                pl.BlockSpec((H_pad, C_pad), lambda i: (0, 0),
                             pipeline_mode=pl.Buffered(1)),             # W (resident, 1 buffer)
                pl.BlockSpec((1, C_pad), lambda i: (0, 0),
                             pipeline_mode=pl.Buffered(1)),             # b (resident, 1 buffer)
                pl.BlockSpec((tile_m, 1), lambda i: (i, 0)),            # labels tile (pipelined)
            ],
            out_specs=[
                pl.BlockSpec((tile_m, C_pad), lambda i: (i, 0)),        # lane-dense logits tile
                pl.BlockSpec((tile_m, 1), lambda i: (i, 0)),            # per-row CE losses
            ],
        ),
        compiler_params=pltpu.CompilerParams(
            # No cross-tile carry -> the batch axis is embarrassingly parallel
            # (shardable across v7x's two TensorCores).
            dimension_semantics=("parallel",),
            vmem_limit_bytes=vmem_limit,
        ),
        cost_estimate=cost,
    )(xp, wp, bp, lp)

    loss = jnp.sum(per_row[:B, 0]) / B
    return logits_pad[:B, :C], loss


if __name__ == "__main__":
    # TODO(synk): BaseNeuralNetwork.forward/fit are abstract in the source; this implements the
    # canonical concrete forward (model logits + loss_func), not training (fit).

    def ref_forward(x, w, b, labels):
        logits = x @ w + b
        lse = jax.scipy.special.logsumexp(logits, axis=-1)
        loss = jnp.mean(lse - logits[jnp.arange(x.shape[0]), labels])
        return logits, loss

    def make_inputs(key, B, H, C):
        kx, kw, kb, ky = jax.random.split(key, 4)
        x = jax.random.normal(kx, (B, H), dtype=jnp.float32)
        w = jax.random.normal(kw, (H, C), dtype=jnp.float32) * 0.1
        b = jax.random.normal(kb, (C,), dtype=jnp.float32) * 0.01
        labels = jax.random.randint(ky, (B,), 0, C, dtype=jnp.int32)
        return x, w, b, labels

    # Case 1: single batch tile, f32 operands.
    x, w, b, labels = make_inputs(jax.random.PRNGKey(0), 8, 32, 16)
    logits, loss = neural_network_forward(x, w, b, labels, 16)
    jax.block_until_ready((logits, loss))
    rl, rL = ref_forward(x, w, b, labels)
    assert jnp.allclose(logits, rl, atol=1e-4, rtol=1e-4)
    assert jnp.allclose(loss, rL, atol=1e-4, rtol=1e-4)

    # Case 2: multi-tile grid with a ragged (padded) last tile -> exercises the parallel per-row
    # loss output and padded-row/class slicing.
    x, w, b, labels = make_inputs(jax.random.PRNGKey(1), 20, 32, 16)
    logits, loss = neural_network_forward(x, w, b, labels, 16, tile_m=8)
    jax.block_until_ready((logits, loss))
    rl, rL = ref_forward(x, w, b, labels)
    assert jnp.allclose(logits, rl, atol=1e-4, rtol=1e-4)
    assert jnp.allclose(loss, rL, atol=1e-4, rtol=1e-4)

    # Case 3: bf16 MXU operands (f32 accumulation, f32 CE math), 16-row sublane tile, looser tol.
    x, w, b, labels = make_inputs(jax.random.PRNGKey(2), 8, 32, 16)
    logits, loss = neural_network_forward(x, w, b, labels, 16,
                                          compute_dtype=jnp.bfloat16)
    jax.block_until_ready((logits, loss))
    rl, rL = ref_forward(x, w, b, labels)
    assert jnp.allclose(logits, rl, atol=5e-2, rtol=5e-2)
    assert jnp.allclose(loss, rL, atol=5e-2, rtol=5e-2)

    print("KERNEL_OK")
</pallas_src>

<mosaic_0001>
module attributes {stable_mosaic.version = 11 : i64} {
  func.func @_nn_loss_kernel(%arg0: i32, %arg1: memref<8x128xf32, #tpu.memory_space<vmem>>, %arg2: memref<128x128xf32, #tpu.memory_space<vmem>>, %arg3: memref<1x128xf32, #tpu.memory_space<vmem>>, %arg4: memref<8x1xi32, #tpu.memory_space<vmem>>, %arg5: memref<8x128xf32, #tpu.memory_space<vmem>>, %arg6: memref<8x1xf32, #tpu.memory_space<vmem>>) attributes {dimension_semantics = [#tpu.dimension_semantics<parallel>], iteration_bounds = array<i64: 1>, scalar_prefetch = 0 : i64, scratch_operands = 0 : i64, tpu.core_type = #tpu.core_type<tc>, window_params = [{transform_indices = @transform_0, window_bounds = array<i64: 8, 128>}, {pipeline_mode = #tpu.pipeline_mode<synchronous>, transform_indices = @transform_1, window_bounds = array<i64: 128, 128>}, {pipeline_mode = #tpu.pipeline_mode<synchronous>, transform_indices = @transform_2, window_bounds = array<i64: 1, 128>}, {transform_indices = @transform_3, window_bounds = array<i64: 8, 1>}, {transform_indices = @transform_4, window_bounds = array<i64: 8, 128>}, {transform_indices = @transform_5, window_bounds = array<i64: 8, 1>}]} {
    %c0 = arith.constant 0 : index
    %c0_0 = arith.constant 0 : index
    %0 = vector.load %arg1[%c0, %c0_0] : memref<8x128xf32, #tpu.memory_space<vmem>>, vector<8x128xf32>
    %c0_1 = arith.constant 0 : index
    %c0_2 = arith.constant 0 : index
    %1 = vector.load %arg2[%c0_1, %c0_2] : memref<128x128xf32, #tpu.memory_space<vmem>>, vector<128x128xf32>
    %cst = arith.constant dense<0.000000e+00> : vector<8x128xf32>
    %2 = tpu.matmul %0, %1, %cst {dimension_numbers = #tpu.dot_dimension_numbers<[1], [0], [0], [1], [0, 0, 1, 1], [], []>} : vector<8x128xf32>, vector<128x128xf32>, vector<8x128xf32> -> vector<8x128xf32>
    %c0_3 = arith.constant 0 : index
    %c0_4 = arith.constant 0 : index
    %3 = vector.load %arg3[%c0_3, %c0_4] : memref<1x128xf32, #tpu.memory_space<vmem>>, vector<1x128xf32>
    %4 = vector.broadcast %3 : vector<1x128xf32> to vector<8x128xf32>
    %5 = arith.addf %2, %4 : vector<8x128xf32>
    %c0_5 = arith.constant 0 : index
    %c0_6 = arith.constant 0 : index
    %6 = vector.load %arg5[%c0_5, %c0_6] : memref<8x128xf32, #tpu.memory_space<vmem>>, vector<8x128xf32>
    tpu.vector_store %arg5[%c0_5, %c0_6], %5 {strides = array<i32>} : memref<8x128xf32, #tpu.memory_space<vmem>>, vector<8x128xf32>,
    %7 = tpu.iota {dimensions = array<i32: 1>} : vector<8x128xi32>
    %cst_7 = arith.constant dense<0xFF800000> : vector<8xf32>
    %8 = vector.multi_reduction <maximumf>, %5, %cst_7 [1] : vector<8x128xf32> to vector<8xf32>
    %9 = vector.shape_cast %8 : vector<8xf32> to vector<8x1xf32>
    %10 = vector.broadcast %9 : vector<8x1xf32> to vector<8x128xf32>
    %11 = arith.subf %5, %10 : vector<8x128xf32>
    %12 = math.exp %11 : vector<8x128xf32>
    %cst_8 = arith.constant dense<0.000000e+00> : vector<8xf32>
    %13 = vector.multi_reduction <add>, %12, %cst_8 [1] : vector<8x128xf32> to vector<8xf32>
    %14 = vector.shape_cast %13 : vector<8xf32> to vector<8x1xf32>
    %15 = math.log %14 : vector<8x1xf32>
    %16 = arith.addf %9, %15 : vector<8x1xf32>
    %c0_9 = arith.constant 0 : index
    %c0_10 = arith.constant 0 : index
    %17 = vector.load %arg4[%c0_9, %c0_10] : memref<8x1xi32, #tpu.memory_space<vmem>>, vector<8x1xi32>
    %18 = vector.broadcast %17 : vector<8x1xi32> to vector<8x128xi32>
    %19 = arith.cmpi eq, %7, %18 : vector<8x128xi32>
    %cst_11 = arith.constant 0.000000e+00 : f32
    %20 = vector.broadcast %cst_11 : f32 to vector<8x128xf32>
    %21 = arith.select %19, %5, %20 : vector<8x128xi1>, vector<8x128xf32>
    %cst_12 = arith.constant dense<0.000000e+00> : vector<8xf32>
    %22 = vector.multi_reduction <add>, %21, %cst_12 [1] : vector<8x128xf32> to vector<8xf32>
    %23 = vector.shape_cast %22 : vector<8xf32> to vector<8x1xf32>
    %24 = arith.subf %16, %23 : vector<8x1xf32>
    %c0_13 = arith.constant 0 : index
    %c0_14 = arith.constant 0 : index
    %25 = vector.load %arg6[%c0_13, %c0_14] : memref<8x1xf32, #tpu.memory_space<vmem>>, vector<8x1xf32>
    tpu.vector_store %arg6[%c0_13, %c0_14], %24 {strides = array<i32>} : memref<8x1xf32, #tpu.memory_space<vmem>>, vector<8x1xf32>,
    return
  }
  func.func @transform_0(%arg0: i32) -> (i32, i32) {
    %c0_i32 = arith.constant 0 : i32
    %c0_i32_0 = arith.constant 0 : i32
    return %arg0, %c0_i32 : i32, i32
  }
  func.func @transform_1(%arg0: i32) -> (i32, i32) {
    %c0_i32 = arith.constant 0 : i32
    %c0_i32_0 = arith.constant 0 : i32
    %c0_i32_1 = arith.constant 0 : i32
    return %c0_i32, %c0_i32_0 : i32, i32
  }
  func.func @transform_2(%arg0: i32) -> (i32, i32) {
    %c0_i32 = arith.constant 0 : i32
    %c0_i32_0 = arith.constant 0 : i32
    %c0_i32_1 = arith.constant 0 : i32
    return %c0_i32, %c0_i32_0 : i32, i32
  }
  func.func @transform_3(%arg0: i32) -> (i32, i32) {
    %c0_i32 = arith.constant 0 : i32
    %c0_i32_0 = arith.constant 0 : i32
    return %arg0, %c0_i32 : i32, i32
  }
  func.func @transform_4(%arg0: i32) -> (i32, i32) {
    %c0_i32 = arith.constant 0 : i32
    %c0_i32_0 = arith.constant 0 : i32
    return %arg0, %c0_i32 : i32, i32
  }
  func.func @transform_5(%arg0: i32) -> (i32, i32) {
    %c0_i32 = arith.constant 0 : i32
    %c0_i32_0 = arith.constant 0 : i32
    return %arg0, %c0_i32 : i32, i32
  }
}

</mosaic_0001>

<llo_original>
// kernel: tpu_custom_call.1
$region0: #{tpu_custom_call.1}
  #allocation0 [shape = 'u32[]', space=smem, size = 0x4, offset = 0x4, fixed_abs, tag = 'smem constant byte address 0x4 - core index']
  #allocation1 [shape = 'u32[144,128]{1,0:T(1,128)}', space=vmem, size = 0x12000, scoped, tag = 'internal scratch']
  %s0 = inlined_call_operand.vmem [shape: f32[8,128], index: 0, kind: input, shape index: {}]
  %s1 = inlined_call_operand.hbm [shape: f32[128,128], index: 1, kind: input, shape index: {}]
  %s2 = inlined_call_operand.vmem [shape: f32[1,128], index: 2, kind: input, shape index: {}]
  %s3 = inlined_call_operand.vmem [shape: s32[8,1], index: 3, kind: input, shape index: {}]
  %s4 = inlined_call_operand.hbm [shape: f32[8,128], index: 4, kind: output, shape index: {0}]
  %s5 = inlined_call_operand.vmem [shape: f32[8,1], index: 5, kind: output, shape index: {1}]
  %6 = xla_tuple %s4, %s5
  %s7 = sld [smem:[#allocation0]]
  $region38: #{tpu_custom_call.1} parent=0
    _
  %s9 = ssub.s32 1, %s7
  %s10 = scalar_select 0, %s9, %s7
  $region1: #{tpu_custom_call.1} parent=0
    #allocation2 [shape = 'u8[65536]{0}', space=vmem, size = 0x10000, scoped, tag = 'input window, operand 1, single buffered']
    #allocation3 [shape = 's32[1]{0}', space=sflag, size = 0x4, scoped, tag = 'scoped memory for tpu_custom_call.1']
    #allocation4 [shape = 's32[1]{0}', space=sflag, size = 0x4, scoped, tag = 'scoped memory for tpu_custom_call.1']
    #allocation5 [shape = 'u8[4096]{0}', space=vmem, size = 0x1000, scoped, tag = 'output window, operand 0, single buffered']
    %11 = vsyncpa [#allocation3], 0
    %12 = vsyncpa [#allocation4], 0
    // Predicated region
    $region2: #{tpu_custom_call.1} parent=1 // pred_check
      _
    $region3: #{tpu_custom_call.1} parent=1 // pred_check_branch
      %14 = sbr.rel (0) target = $region5
    $region4: #{tpu_custom_call.1} parent=1 // pred_region
      _
    $region5: #{tpu_custom_call.1} parent=1 // pred_fallthru
      _
    // Predicated region
    $region6: #{tpu_custom_call.1} parent=1 // pred_check
      _
    $region7: #{tpu_custom_call.1} parent=1 // pred_check_branch
      %16 = sbr.rel (0) target = $region9
    $region8: #{tpu_custom_call.1} parent=1 // pred_region
      %s18 = ssub.s32 2048, 2048
      %19 = vsyncadd [#allocation3], %s18
      %s20 = sshll.u32 [#allocation2], 4
      %s21 = int_to_ptr.vmem [resolvable:$true] %s20
      %26 = dma.hbm_to_vmem [thread:$0]  %s1, 2048, %s21, [#allocation3], 128, 128, 8
    $region9: #{tpu_custom_call.1} parent=1 // pred_fallthru
      _
    // Predicated region
    $region10: #{tpu_custom_call.1} parent=1 // pred_check
      _
    $region11: #{tpu_custom_call.1} parent=1 // pred_check_branch
      %28 = sbr.rel (0) target = $region13
    $region12: #{tpu_custom_call.1} parent=1 // pred_region
      _
    $region13: #{tpu_custom_call.1} parent=1 // pred_fallthru
      _
    // Predicated region
    $region14: #{tpu_custom_call.1} parent=1 // pred_check
      _
    $region15: #{tpu_custom_call.1} parent=1 // pred_check_branch
      %30 = sbr.rel (0) target = $region17
    $region16: #{tpu_custom_call.1} parent=1 // pred_region
      _
    $region17: #{tpu_custom_call.1} parent=1 // pred_fallthru
      _
    // Predicated region
    $region18: #{tpu_custom_call.1} parent=1 // pred_check
      _
    $region19: #{tpu_custom_call.1} parent=1 // pred_check_branch
      %32 = sbr.rel (0) target = $region21
    $region20: #{tpu_custom_call.1} parent=1 // pred_region
      %33 = dma.done [#allocation3], 2048
    $region21: #{tpu_custom_call.1} parent=1 // pred_fallthru
      _
    %v34 = vld [vmem:[%s0] sm:$0xff]
    %v35 = vld [vmem:[#allocation2] sm:$0xff]
    %v36 = vld [vmem:[#allocation2 + $0x8] sm:$0xff]
    %v37 = vld [vmem:[#allocation2 + $0x10] sm:$0xff]
    %v38 = vld [vmem:[#allocation2 + $0x18] sm:$0xff]
    %v39 = vld [vmem:[#allocation2 + $0x20] sm:$0xff]
    %v40 = vld [vmem:[#allocation2 + $0x28] sm:$0xff]
    %v41 = vld [vmem:[#allocation2 + $0x30] sm:$0xff]
    %v42 = vld [vmem:[#allocation2 + $0x38] sm:$0xff]
    %v43 = vld [vmem:[#allocation2 + $0x40] sm:$0xff]
    %v44 = vld [vmem:[#allocation2 + $0x48] sm:$0xff]
    %v45 = vld [vmem:[#allocation2 + $0x50] sm:$0xff]
    %v46 = vld [vmem:[#allocation2 + $0x58] sm:$0xff]
    %v47 = vld [vmem:[#allocation2 + $0x60] sm:$0xff]
    %v48 = vld [vmem:[#allocation2 + $0x68] sm:$0xff]
    %v49 = vld [vmem:[#allocation2 + $0x70] sm:$0xff]
    %v50 = vld [vmem:[#allocation2 + $0x78] sm:$0xff]
    %v51 = vld [vmem:[%s2] sm:$0x1]
    %v53 = vlaneseq
    %v54 = vshrl.u32 %v53, 7
    %v55 = vsub.s32 0, %v54
    %v56 = vrot.slane %v51, %v55
    %58 = vmatprep.subr.mxu0 0.0
    %59 = vmatpush1.msra.mxu0 %v50
    %60 = vmatprep.subr.mxu0 0.0
    %61 = vmatpush1.msra.mxu0 %v49
    %62 = vmatprep.subr.mxu0 0.0
    %63 = vmatpush1.msra.mxu0 %v48
    %64 = vmatprep.subr.mxu0 0.0
    %65 = vmatpush1.msra.mxu0 %v47
    %66 = vmatprep.subr.mxu0 0.0
    %67 = vmatpush1.msra.mxu0 %v46
    %68 = vmatprep.subr.mxu0 0.0
    %69 = vmatpush1.msra.mxu0 %v45
    %70 = vmatprep.subr.mxu0 0.0
    %71 = vmatpush1.msra.mxu0 %v44
    %72 = vmatprep.subr.mxu0 0.0
    %73 = vmatpush1.msra.mxu0 %v43
    %74 = vmatprep.subr.mxu0 0.0
    %75 = vmatpush1.msra.mxu0 %v42
    %76 = vmatprep.subr.mxu0 0.0
    %77 = vmatpush1.msra.mxu0 %v41
    %78 = vmatprep.subr.mxu0 0.0
    %79 = vmatpush1.msra.mxu0 %v40
    %80 = vmatprep.subr.mxu0 0.0
    %81 = vmatpush1.msra.mxu0 %v39
    %82 = vmatprep.subr.mxu0 0.0
    %83 = vmatpush1.msra.mxu0 %v38
    %84 = vmatprep.subr.mxu0 0.0
    %85 = vmatpush1.msra.mxu0 %v37
    %86 = vmatprep.subr.mxu0 0.0
    %87 = vmatpush1.msra.mxu0 %v36
    %88 = vmatprep.subr.mxu0 0.0
    %89 = vmatpush1.msra.mxu0 %v35
    %90 = vmatprep.subr.mxu0 0.0
    %91 = vmatpush2.msra.mxu0 0.0
    %92 = vmatprep.subr.mxu0 0.0
    %93 = vmatpush2.msra.mxu0 0.0
    %94 = vmatprep.subr.mxu0 0.0
    %95 = vmatpush2.msra.mxu0 0.0
    %96 = vmatprep.subr.mxu0 0.0
    %97 = vmatpush2.msra.mxu0 0.0
    %98 = vmatprep.subr.mxu0 0.0
    %99 = vmatpush2.msra.mxu0 0.0
    %100 = vmatprep.subr.mxu0 0.0
    %101 = vmatpush2.msra.mxu0 0.0
    %102 = vmatprep.subr.mxu0 0.0
    %103 = vmatpush2.msra.mxu0 0.0
    %104 = vmatprep.subr.mxu0 0.0
    %105 = vmatpush2.msra.mxu0 0.0
    %106 = vmatprep.subr.mxu0 0.0
    %107 = vmatpush2.msra.mxu0 0.0
    %108 = vmatprep.subr.mxu0 0.0
    %109 = vmatpush2.msra.mxu0 0.0
    %110 = vmatprep.subr.mxu0 0.0
    %111 = vmatpush2.msra.mxu0 0.0
    %112 = vmatprep.subr.mxu0 0.0
    %113 = vmatpush2.msra.mxu0 0.0
    %114 = vmatprep.subr.mxu0 0.0
    %115 = vmatpush2.msra.mxu0 0.0
    %116 = vmatprep.subr.mxu0 0.0
    %117 = vmatpush2.msra.mxu0 0.0
    %118 = vmatprep.subr.mxu0 0.0
    %119 = vmatpush2.msra.mxu0 0.0
    %120 = vmatprep.subr.mxu0 0.0
    %121 = vmatpush2.msra.mxu0 0.0
    %122 = vmatprep.mubr.f32.mxu0 0.0
    %123 = vmatmul.mubr.f32.gmra.mxu0 %v34
    %v124 = vpop.f32.mrf.mxu0
    %v125 = vadd.f32 %v56, %v124
    %v126 = vpop.f32.mrf.mxu0
    %127 = vdwg.mxu0
    %128 = vst [vmem:[#allocation5] sm:$0xff] %v125
    %v129 = vlaneseq
    %v130 = vand.u32 %v129, 127
    %131 = vmax.xlane.f32.xlu0 %v125
    %v132 = vpop.xlane.xlu0 %131
    %v133 = vsub.f32 %v125, %v132
    %v134 = vmul.f32 %v133, 1.442695
    %v135 = vpow.pop %v134
    %136 = vadd.xlane.f32.xlu0 %v135
    %v137 = vpop.xlane.xlu0 %136
    %v138 = vlog2.pop %v137
    %v139 = vmul.f32 %v138, 0.6931472
    %v140 = vadd.f32 %v132, %v139
    %v141 = vld [vmem:[%s3] sm:$0xff]
    %142 = vset.pattern.permute.xlu0 0
    %143 = vperm.xlu0 %142, %v141
    %v144 = vpop.permute.xlu0 %143
    %vm145 = vcmp.eq.s32.totalorder %v130, %v144
    %v146 = vsel %vm145, %v125, 0.0
    %147 = vadd.xlane.f32.xlu0 %v146
    %v148 = vpop.xlane.xlu0 %147
    %v149 = vsub.f32 %v140, %v148
    %vm150 = vcmask 7168
    %151 = vst.msk [vmem:[%s5] sm:$0xff] %vm150, %v149
    // Predicated region
    $region22: #{tpu_custom_call.1} parent=1 // pred_check
      _
    $region23: #{tpu_custom_call.1} parent=1 // pred_check_branch
      %153 = sbr.rel (0) target = $region25
    $region24: #{tpu_custom_call.1} parent=1 // pred_region
      %s155 = ssub.s32 128, 128
      %156 = vsyncadd [#allocation4], %s155
      %s158 = sshll.u32 [#allocation5], 4
      %s159 = int_to_ptr.vmem [resolvable:$true] %s158
      %161 = dma.vmem_to_hbm [thread:$0]  %s159, 128, %s4, [#allocation4]
    $region25: #{tpu_custom_call.1} parent=1 // pred_fallthru
      _
    // Predicated region
    $region26: #{tpu_custom_call.1} parent=1 // pred_check
      _
    $region27: #{tpu_custom_call.1} parent=1 // pred_check_branch
      %163 = sbr.rel (0) target = $region29
    $region28: #{tpu_custom_call.1} parent=1 // pred_region
      _
    $region29: #{tpu_custom_call.1} parent=1 // pred_fallthru
      _
    // Predicated region
    $region30: #{tpu_custom_call.1} parent=1 // pred_check
      _
    $region31: #{tpu_custom_call.1} parent=1 // pred_check_branch
      %165 = sbr.rel (0) target = $region33
    $region32: #{tpu_custom_call.1} parent=1 // pred_region
      %166 = dma.done [#allocation4], 128
    $region33: #{tpu_custom_call.1} parent=1 // pred_fallthru
      _
    // Predicated region
    $region34: #{tpu_custom_call.1} parent=1 // pred_check
      _
    $region35: #{tpu_custom_call.1} parent=1 // pred_check_branch
      %168 = sbr.rel (0) target = $region37
    $region36: #{tpu_custom_call.1} parent=1 // pred_region
      _
    $region37: #{tpu_custom_call.1} parent=1 // pred_fallthru
      _
    %169 = vsyncpa [#allocation3], 1
    %170 = vsyncpa [#allocation4], 1

</llo_original>
